<compile_context>
chip_gen: v6e
topology: v6e:2x2x1
jax: 0.10.0
libtpu: 0.0.40
codegen_flags: <defaults>
</compile_context>

<pallas_src>
import jax
import jax.numpy as jnp
import numpy as np
from jax.experimental import pallas as pl
from jax.experimental.pallas import tpu as pltpu


def _round_up(x, m):
    return ((x + m - 1) // m) * m


def _stacked_gru_kernel(x_ref, h0_ref, wih_ref, whh_ref, bfold_ref, bhn_ref,
                        h1_ref, inp_sc):
    """One grid step == one GRU layer. Gate order [r, z, n] (PyTorch GRUCell).

    r  = sigmoid(x W_ir + b_ir + h W_hr + b_hr)
    z  = sigmoid(x W_iz + b_iz + h W_hz + b_hz)
    n  = tanh   (x W_in + b_in + r * (h W_hn + b_hn))
    h' = (1 - z) * n + z * h
    """
    layer = pl.program_id(0)
    Hp = h0_ref.shape[-1]

    # Layer 0 consumes the external input; later layers consume the carry.
    @pl.when(layer == 0)
    def _():
        inp_sc[...] = x_ref[...].astype(jnp.float32)

    inp = inp_sc[...]                      # (B, IN_MAX) f32 carry
    h = h0_ref[0]                          # (B, Hp)     f32

    # Fused gate matmuls: 2 MXU pushes (bf16 operands, f32 accumulation).
    gi = jnp.dot(inp.astype(wih_ref.dtype), wih_ref[0],
                 preferred_element_type=jnp.float32) + bfold_ref[0]
    gh = jnp.dot(h.astype(whh_ref.dtype), whh_ref[0],
                 preferred_element_type=jnp.float32)

    r = jax.nn.sigmoid(gi[:, 0:Hp] + gh[:, 0:Hp])
    z = jax.nn.sigmoid(gi[:, Hp:2 * Hp] + gh[:, Hp:2 * Hp])
    n = jnp.tanh(gi[:, 2 * Hp:3 * Hp] + r * (gh[:, 2 * Hp:3 * Hp] + bhn_ref[0]))
    h_new = (1.0 - z) * n + z * h

    h1_ref[0] = h_new.astype(h1_ref.dtype)
    # Carry this layer's output (kept in f32) as the next layer's input.
    inp_sc[:, 0:Hp] = h_new


def init_stacked_gru_params(key, num_layers, input_size, hidden_size,
                            dtype=jnp.float32):
    """Mirrors nn.GRUCell init U(-1/sqrt(H), 1/sqrt(H)); per-gate layout."""
    params = []
    bound = 1.0 / np.sqrt(hidden_size)
    in_size = input_size
    for _ in range(num_layers):
        key, k1, k2, k3, k4 = jax.random.split(key, 5)
        w_ih = jax.random.uniform(k1, (3, in_size, hidden_size), dtype, -bound, bound)
        w_hh = jax.random.uniform(k2, (3, hidden_size, hidden_size), dtype, -bound, bound)
        b_ih = jax.random.uniform(k3, (3, hidden_size), dtype, -bound, bound)
        b_hh = jax.random.uniform(k4, (3, hidden_size), dtype, -bound, bound)
        params.append((w_ih, w_hh, b_ih, b_hh))
        in_size = hidden_size
    return params


def _prepare_packed_params(params, hidden_size, in_max, h_pad, weight_dtype):
    """Fuse gates, pad to lane-dense shapes, stack over layers."""
    H = hidden_size
    wih_all, whh_all, bfold_all, bhn_all = [], [], [], []
    for (w_ih, w_hh, b_ih, b_hh) in params:
        in_l = w_ih.shape[1]
        wih = jnp.zeros((in_max, 3, h_pad), weight_dtype)
        wih = wih.at[:in_l, :, :H].set(
            jnp.transpose(w_ih, (1, 0, 2)).astype(weight_dtype))
        wih_all.append(wih.reshape(in_max, 3 * h_pad))

        whh = jnp.zeros((h_pad, 3, h_pad), weight_dtype)
        whh = whh.at[:H, :, :H].set(
            jnp.transpose(w_hh, (1, 0, 2)).astype(weight_dtype))
        whh_all.append(whh.reshape(h_pad, 3 * h_pad))

        # Fold b_hh into b_ih for the r/z gates; keep b_hn separate (inside r*(.)).
        fold = b_ih + b_hh.at[2].set(0.0)                    # (3, H) f32
        bf = jnp.zeros((3, h_pad), jnp.float32).at[:, :H].set(fold)
        bfold_all.append(bf.reshape(1, 3 * h_pad))
        bn = jnp.zeros((1, h_pad), jnp.float32).at[0, :H].set(b_hh[2])
        bhn_all.append(bn)

    return (jnp.stack(wih_all), jnp.stack(whh_all),
            jnp.stack(bfold_all), jnp.stack(bhn_all))


def stacked_gru_forward(params, x, h0, *, weight_dtype=jnp.bfloat16):
    """params: per-layer (w_ih(3,in,H), w_hh(3,H,H), b_ih(3,H), b_hh(3,H));
    x: (B, I); h0: (L, B, H). Returns (output, h1) like StackedGRU.forward."""
    L = len(params)
    B, I = x.shape
    H = h0.shape[-1]
    B_pad = _round_up(B, 8)
    H_pad = _round_up(H, 128)
    IN_MAX = max(_round_up(I, 128), H_pad)

    wih, whh, bfold, bhn = _prepare_packed_params(params, H, IN_MAX, H_pad,
                                                  weight_dtype)

    x_pad = jnp.zeros((B_pad, IN_MAX), jnp.float32).at[:B, :I].set(
        x.astype(jnp.float32))
    h0_pad = jnp.zeros((L, B_pad, H_pad), jnp.float32).at[:, :B, :H].set(
        h0.astype(jnp.float32))

    # VMEM budget: per-layer streamed blocks (double buffered) + residents.
    per_layer = ((IN_MAX + H_pad) * 3 * H_pad) * wih.dtype.itemsize \
        + (2 * B_pad * H_pad + 4 * H_pad) * 4
    vmem_limit = int(min(100 * 2**20,
                         max(8 * 2**20, 3 * per_layer + 8 * B_pad * IN_MAX)))

    grid_spec = pltpu.PrefetchScalarGridSpec(
        num_scalar_prefetch=0,
        grid=(L,),
        in_specs=[
            pl.BlockSpec((B_pad, IN_MAX), lambda l: (0, 0)),          # x (resident)
            pl.BlockSpec((1, B_pad, H_pad), lambda l: (l, 0, 0)),     # h0[l]
            pl.BlockSpec((1, IN_MAX, 3 * H_pad), lambda l: (l, 0, 0)),  # W_ih[l]
            pl.BlockSpec((1, H_pad, 3 * H_pad), lambda l: (l, 0, 0)),   # W_hh[l]
            pl.BlockSpec((1, 1, 3 * H_pad), lambda l: (l, 0, 0)),     # folded bias
            pl.BlockSpec((1, 1, H_pad), lambda l: (l, 0, 0)),         # b_hn
        ],
        out_specs=pl.BlockSpec((1, B_pad, H_pad), lambda l: (l, 0, 0)),
        scratch_shapes=[pltpu.VMEM((B_pad, IN_MAX), jnp.float32)],
    )

    h1_pad = pl.pallas_call(
        _stacked_gru_kernel,
        out_shape=jax.ShapeDtypeStruct((L, B_pad, H_pad), jnp.float32),
        grid_spec=grid_spec,
        compiler_params=pltpu.CompilerParams(
            dimension_semantics=("arbitrary",),   # layers are sequential
            vmem_limit_bytes=vmem_limit),
    )(x_pad, h0_pad, wih, whh, bfold, bhn)

    h1 = h1_pad[:, :B, :H]
    return h1[-1], h1


def _reference_forward(params, x, h0, weight_dtype=jnp.bfloat16):
    """Pure-JAX f32 reference using the same bf16-quantized weight values."""
    inp = x
    h1 = []
    for i, (w_ih, w_hh, b_ih, b_hh) in enumerate(params):
        w_ih = w_ih.astype(weight_dtype).astype(jnp.float32)
        w_hh = w_hh.astype(weight_dtype).astype(jnp.float32)
        h = h0[i]
        ig = [inp @ w_ih[g] + b_ih[g] for g in range(3)]
        hg = [h @ w_hh[g] + b_hh[g] for g in range(3)]
        r = jax.nn.sigmoid(ig[0] + hg[0])
        z = jax.nn.sigmoid(ig[1] + hg[1])
        n = jnp.tanh(ig[2] + r * hg[2])
        h_new = (1.0 - z) * n + z * h
        inp = h_new
        h1.append(h_new)
    return inp, jnp.stack(h1)


if __name__ == "__main__":
    num_layers = 3
    input_size = 16
    hidden_size = 32
    batch = 8

    key = jax.random.PRNGKey(0)
    k_params, k_x, k_h = jax.random.split(key, 3)

    params = init_stacked_gru_params(k_params, num_layers, input_size, hidden_size)
    x = jax.random.normal(k_x, (batch, input_size), jnp.float32)
    h0 = jax.random.normal(k_h, (num_layers, batch, hidden_size), jnp.float32)

    out, h1 = stacked_gru_forward(params, x, h0)
    out = jax.block_until_ready(out)
    h1 = jax.block_until_ready(h1)

    ref_out, ref_h1 = _reference_forward(params, x, h0)
    np.testing.assert_allclose(np.asarray(out), np.asarray(ref_out), rtol=1e-2, atol=1e-2)
    np.testing.assert_allclose(np.asarray(h1), np.asarray(ref_h1), rtol=1e-2, atol=1e-2)

    print("KERNEL_OK")
</pallas_src>

<mosaic_0001>
module attributes {stable_mosaic.version = 11 : i64} {
  func.func @_stacked_gru_kernel(%arg0: i32, %arg1: memref<8x128xf32, #tpu.memory_space<vmem>>, %arg2: memref<1x8x128xf32, #tpu.memory_space<vmem>>, %arg3: memref<1x128x384xbf16, #tpu.memory_space<vmem>>, %arg4: memref<1x128x384xbf16, #tpu.memory_space<vmem>>, %arg5: memref<1x1x384xf32, #tpu.memory_space<vmem>>, %arg6: memref<1x1x128xf32, #tpu.memory_space<vmem>>, %arg7: memref<1x8x128xf32, #tpu.memory_space<vmem>>, %arg8: memref<8x128xf32, #tpu.memory_space<vmem>>) attributes {dimension_semantics = [#tpu.dimension_semantics<arbitrary>], iteration_bounds = array<i64: 3>, scalar_prefetch = 0 : i64, scratch_operands = 1 : i64, tpu.core_type = #tpu.core_type<tc>, window_params = [{pipeline_mode = #tpu.pipeline_mode<synchronous>, transform_indices = @transform_0, window_bounds = array<i64: 8, 128>}, {transform_indices = @transform_1, window_bounds = array<i64: 1, 8, 128>}, {transform_indices = @transform_2, window_bounds = array<i64: 1, 128, 384>}, {transform_indices = @transform_3, window_bounds = array<i64: 1, 128, 384>}, {transform_indices = @transform_4, window_bounds = array<i64: 1, 1, 384>}, {transform_indices = @transform_5, window_bounds = array<i64: 1, 1, 128>}, {transform_indices = @transform_6, window_bounds = array<i64: 1, 8, 128>}]} {
    %c0_i32 = arith.constant 0 : i32
    %0 = arith.cmpi eq, %arg0, %c0_i32 : i32
    %1 = arith.extui %0 : i1 to i32
    %c0_i32_0 = arith.constant 0 : i32
    %2 = arith.cmpi ne, %1, %c0_i32_0 : i32
    scf.if %2 {
      %c0_26 = arith.constant 0 : index
      %c0_27 = arith.constant 0 : index
      %52 = vector.load %arg1[%c0_26, %c0_27] : memref<8x128xf32, #tpu.memory_space<vmem>>, vector<8x128xf32>
      %c0_28 = arith.constant 0 : index
      %c0_29 = arith.constant 0 : index
      %53 = vector.load %arg8[%c0_28, %c0_29] : memref<8x128xf32, #tpu.memory_space<vmem>>, vector<8x128xf32>
      tpu.vector_store %arg8[%c0_28, %c0_29], %52 {strides = array<i32>} : memref<8x128xf32, #tpu.memory_space<vmem>>, vector<8x128xf32>,
    } else {
    }
    %c0 = arith.constant 0 : index
    %c0_1 = arith.constant 0 : index
    %3 = vector.load %arg8[%c0, %c0_1] : memref<8x128xf32, #tpu.memory_space<vmem>>, vector<8x128xf32>
    %c0_2 = arith.constant 0 : index
    %c0_3 = arith.constant 0 : index
    %c0_4 = arith.constant 0 : index
    %4 = vector.load %arg2[%c0_2, %c0_3, %c0_4] : memref<1x8x128xf32, #tpu.memory_space<vmem>>, vector<1x8x128xf32>
    %5 = vector.shape_cast %4 : vector<1x8x128xf32> to vector<8x128xf32>
    %6 = arith.truncf %3 : vector<8x128xf32> to vector<8x128xbf16>
    %c0_5 = arith.constant 0 : index
    %c0_6 = arith.constant 0 : index
    %c0_7 = arith.constant 0 : index
    %7 = vector.load %arg3[%c0_5, %c0_6, %c0_7] : memref<1x128x384xbf16, #tpu.memory_space<vmem>>, vector<1x128x384xbf16>
    %8 = vector.shape_cast %7 : vector<1x128x384xbf16> to vector<128x384xbf16>
    %cst = arith.constant dense<0.000000e+00> : vector<8x384xf32>
    %9 = tpu.matmul %6, %8, %cst {dimension_numbers = #tpu.dot_dimension_numbers<[1], [0], [0], [1], [0, 0, 1, 1], [], []>} : vector<8x128xbf16>, vector<128x384xbf16>, vector<8x384xf32> -> vector<8x384xf32>
    %c0_8 = arith.constant 0 : index
    %c0_9 = arith.constant 0 : index
    %c0_10 = arith.constant 0 : index
    %10 = vector.load %arg5[%c0_8, %c0_9, %c0_10] : memref<1x1x384xf32, #tpu.memory_space<vmem>>, vector<1x1x384xf32>
    %11 = vector.shape_cast %10 : vector<1x1x384xf32> to vector<1x384xf32>
    %12 = vector.broadcast %11 : vector<1x384xf32> to vector<8x384xf32>
    %13 = arith.addf %9, %12 : vector<8x384xf32>
    %14 = arith.truncf %5 : vector<8x128xf32> to vector<8x128xbf16>
    %c0_11 = arith.constant 0 : index
    %c0_12 = arith.constant 0 : index
    %c0_13 = arith.constant 0 : index
    %15 = vector.load %arg4[%c0_11, %c0_12, %c0_13] : memref<1x128x384xbf16, #tpu.memory_space<vmem>>, vector<1x128x384xbf16>
    %16 = vector.shape_cast %15 : vector<1x128x384xbf16> to vector<128x384xbf16>
    %cst_14 = arith.constant dense<0.000000e+00> : vector<8x384xf32>
    %17 = tpu.matmul %14, %16, %cst_14 {dimension_numbers = #tpu.dot_dimension_numbers<[1], [0], [0], [1], [0, 0, 1, 1], [], []>} : vector<8x128xbf16>, vector<128x384xbf16>, vector<8x384xf32> -> vector<8x384xf32>
    %18 = vector.extract_strided_slice %13 {offsets = [0, 0], sizes = [8, 128], strides = [1, 1]} : vector<8x384xf32> to vector<8x128xf32>
    %19 = vector.extract_strided_slice %17 {offsets = [0, 0], sizes = [8, 128], strides = [1, 1]} : vector<8x384xf32> to vector<8x128xf32>
    %20 = arith.addf %18, %19 : vector<8x128xf32>
    %21 = arith.negf %20 : vector<8x128xf32>
    %22 = math.exp %21 : vector<8x128xf32>
    %cst_15 = arith.constant 1.000000e+00 : f32
    %23 = vector.broadcast %cst_15 : f32 to vector<8x128xf32>
    %24 = arith.addf %23, %22 : vector<8x128xf32>
    %25 = arith.divf %23, %24 : vector<8x128xf32>
    %26 = vector.extract_strided_slice %13 {offsets = [0, 128], sizes = [8, 128], strides = [1, 1]} : vector<8x384xf32> to vector<8x128xf32>
    %27 = vector.extract_strided_slice %17 {offsets = [0, 128], sizes = [8, 128], strides = [1, 1]} : vector<8x384xf32> to vector<8x128xf32>
    %28 = arith.addf %26, %27 : vector<8x128xf32>
    %29 = arith.negf %28 : vector<8x128xf32>
    %30 = math.exp %29 : vector<8x128xf32>
    %cst_16 = arith.constant 1.000000e+00 : f32
    %31 = vector.broadcast %cst_16 : f32 to vector<8x128xf32>
    %32 = arith.addf %31, %30 : vector<8x128xf32>
    %33 = arith.divf %31, %32 : vector<8x128xf32>
    %34 = vector.extract_strided_slice %13 {offsets = [0, 256], sizes = [8, 128], strides = [1, 1]} : vector<8x384xf32> to vector<8x128xf32>
    %35 = vector.extract_strided_slice %17 {offsets = [0, 256], sizes = [8, 128], strides = [1, 1]} : vector<8x384xf32> to vector<8x128xf32>
    %c0_17 = arith.constant 0 : index
    %c0_18 = arith.constant 0 : index
    %c0_19 = arith.constant 0 : index
    %36 = vector.load %arg6[%c0_17, %c0_18, %c0_19] : memref<1x1x128xf32, #tpu.memory_space<vmem>>, vector<1x1x128xf32>
    %37 = vector.shape_cast %36 : vector<1x1x128xf32> to vector<1x128xf32>
    %38 = vector.broadcast %37 : vector<1x128xf32> to vector<8x128xf32>
    %39 = arith.addf %35, %38 : vector<8x128xf32>
    %40 = arith.mulf %25, %39 : vector<8x128xf32>
    %41 = arith.addf %34, %40 : vector<8x128xf32>
    %42 = math.tanh %41 : vector<8x128xf32>
    %cst_20 = arith.constant 1.000000e+00 : f32
    %43 = vector.broadcast %cst_20 : f32 to vector<8x128xf32>
    %44 = arith.subf %43, %33 : vector<8x128xf32>
    %45 = arith.mulf %44, %42 : vector<8x128xf32>
    %46 = arith.mulf %33, %5 : vector<8x128xf32>
    %47 = arith.addf %45, %46 : vector<8x128xf32>
    %c0_21 = arith.constant 0 : index
    %c0_22 = arith.constant 0 : index
    %c0_23 = arith.constant 0 : index
    %48 = vector.load %arg7[%c0_21, %c0_22, %c0_23] : memref<1x8x128xf32, #tpu.memory_space<vmem>>, vector<1x8x128xf32>
    %49 = vector.shape_cast %48 : vector<1x8x128xf32> to vector<8x128xf32>
    %50 = vector.shape_cast %47 : vector<8x128xf32> to vector<1x8x128xf32>
    tpu.vector_store %arg7[%c0_21, %c0_22, %c0_23], %50 {strides = array<i32>} : memref<1x8x128xf32, #tpu.memory_space<vmem>>, vector<1x8x128xf32>,
    %c0_24 = arith.constant 0 : index
    %c0_25 = arith.constant 0 : index
    %51 = vector.load %arg8[%c0_24, %c0_25] : memref<8x128xf32, #tpu.memory_space<vmem>>, vector<8x128xf32>
    tpu.vector_store %arg8[%c0_24, %c0_25], %47 {strides = array<i32>} : memref<8x128xf32, #tpu.memory_space<vmem>>, vector<8x128xf32>,
    return
  }
  func.func @transform_0(%arg0: i32) -> (i32, i32) {
    %c0_i32 = arith.constant 0 : i32
    %c0_i32_0 = arith.constant 0 : i32
    %c0_i32_1 = arith.constant 0 : i32
    return %c0_i32, %c0_i32_0 : i32, i32
  }
  func.func @transform_1(%arg0: i32) -> (i32, i32, i32) {
    %c0_i32 = arith.constant 0 : i32
    %c0_i32_0 = arith.constant 0 : i32
    %c0_i32_1 = arith.constant 0 : i32
    return %arg0, %c0_i32, %c0_i32_0 : i32, i32, i32
  }
  func.func @transform_2(%arg0: i32) -> (i32, i32, i32) {
    %c0_i32 = arith.constant 0 : i32
    %c0_i32_0 = arith.constant 0 : i32
    %c0_i32_1 = arith.constant 0 : i32
    return %arg0, %c0_i32, %c0_i32_0 : i32, i32, i32
  }
  func.func @transform_3(%arg0: i32) -> (i32, i32, i32) {
    %c0_i32 = arith.constant 0 : i32
    %c0_i32_0 = arith.constant 0 : i32
    %c0_i32_1 = arith.constant 0 : i32
    return %arg0, %c0_i32, %c0_i32_0 : i32, i32, i32
  }
  func.func @transform_4(%arg0: i32) -> (i32, i32, i32) {
    %c0_i32 = arith.constant 0 : i32
    %c0_i32_0 = arith.constant 0 : i32
    %c0_i32_1 = arith.constant 0 : i32
    return %arg0, %c0_i32, %c0_i32_0 : i32, i32, i32
  }
  func.func @transform_5(%arg0: i32) -> (i32, i32, i32) {
    %c0_i32 = arith.constant 0 : i32
    %c0_i32_0 = arith.constant 0 : i32
    %c0_i32_1 = arith.constant 0 : i32
    return %arg0, %c0_i32, %c0_i32_0 : i32, i32, i32
  }
  func.func @transform_6(%arg0: i32) -> (i32, i32, i32) {
    %c0_i32 = arith.constant 0 : i32
    %c0_i32_0 = arith.constant 0 : i32
    %c0_i32_1 = arith.constant 0 : i32
    return %arg0, %c0_i32, %c0_i32_0 : i32, i32, i32
  }
}

</mosaic_0001>

<llo_original>
// kernel: tpu_custom_call.1
$region0: #{tpu_custom_call.1}
  #allocation0 [shape = 'u32[]', space=smem, size = 0x4, offset = 0x4, fixed_abs, tag = 'smem constant byte address 0x4 - core index']
  #allocation1 [shape = 'u32[144,128]{1,0:T(1,128)}', space=vmem, size = 0x12000, scoped, tag = 'internal scratch']
  #allocation2 [shape = 'f32[8,128]{1,0:T(8,128)}', space=vmem, size = 0x1000, scoped, tag = 'scratch operand']
  %s0 = inlined_call_operand.hbm [shape: f32[8,128], index: 0, kind: input, shape index: {}]
  %s1 = inlined_call_operand.hbm [shape: f32[3,8,128], index: 1, kind: input, shape index: {}]
  %s2 = inlined_call_operand.hbm [shape: bf16[3,128,384], index: 2, kind: input, shape index: {}]
  %s3 = inlined_call_operand.hbm [shape: bf16[3,128,384], index: 3, kind: input, shape index: {}]
  %s4 = inlined_call_operand.hbm [shape: f32[3,1,384], index: 4, kind: input, shape index: {}]
  %s5 = inlined_call_operand.vmem [shape: f32[3,1,128], index: 5, kind: input, shape index: {}]
  %s6 = inlined_call_operand.hbm [shape: f32[3,8,128], index: 6, kind: output, shape index: {}]
  %s7 = sld [smem:[#allocation0]]
  $region81: #{tpu_custom_call.1} parent=0
    _
  %s9 = ssub.s32 1, %s7
  %s10 = scalar_select 0, %s9, %s7
  $region1: #{tpu_custom_call.1} parent=0
    #allocation3 [shape = 'u8[4096]{0}', space=vmem, size = 0x1000, scoped, tag = 'input window, operand 0, single buffered']
    #allocation4 [shape = 's32[2]{0}', space=sflag, size = 0x8, scoped, tag = 'scoped memory for tpu_custom_call.1']
    #allocation5 [shape = 's32[2]{0}', space=sflag, size = 0x8, scoped, tag = 'scoped memory for tpu_custom_call.1']
    #allocation6 [shape = 'u8[8192]{0}', space=vmem, size = 0x2000, scoped, tag = 'input window, operand 1']
    #allocation7 [shape = 's32[2]{0}', space=sflag, size = 0x8, scoped, tag = 'scoped memory for tpu_custom_call.1']
    #allocation8 [shape = 'u8[196608]{0}', space=vmem, size = 0x30000, scoped, tag = 'input window, operand 2']
    #allocation9 [shape = 'u8[196608]{0}', space=vmem, size = 0x30000, scoped, tag = 'input window, operand 3']
    #allocation10 [shape = 's32[2]{0}', space=sflag, size = 0x8, scoped, tag = 'scoped memory for tpu_custom_call.1']
    #allocation11 [shape = 'u8[3072]{0}', space=vmem, size = 0xc00, scoped, tag = 'input window, operand 4']
    #allocation12 [shape = 'u8[8192]{0}', space=vmem, size = 0x2000, scoped, tag = 'output window, operand 0']
    %11 = vsyncpa [#allocation4], 0
    %12 = vsyncpa [#allocation7], 0
    %s13 = scalar_lea.sflag [#allocation7], 1
    %14 = vsyncpa %s13, 0
    %15 = vsyncpa [#allocation10], 0
    %s16 = scalar_lea.sflag [#allocation10], 1
    %17 = vsyncpa %s16, 0
    %18 = vsyncpa [#allocation5], 0
    %s19 = scalar_lea.sflag [#allocation5], 1
    %20 = vsyncpa %s19, 0
    loop: start=0, step=1, limit=5
    $region2: #{tpu_custom_call.1} parent=1 // loop_pre_header
      _
    $region3: #{tpu_custom_call.1} parent=1 // loop_header
      %s22 = sphi 0, %s26
      %p23 = scmp.ge.s32.totalorder %s22, 5
      %s30 = sphi 0, %s30
      %s32 = sphi 0, %s30
      %s33 = sphi 0, %s32
      %s47 = sphi 0, %s33
      %s53 = sphi 0, %s55
      %s56 = sphi 0, %s53
      %s57 = sphi 0, %s56
      %s73 = sphi 0, %s57
      %s79 = sphi 0, %s81
      %s82 = sphi 0, %s79
      %s83 = sphi 0, %s82
      %s99 = sphi 0, %s83
      %s105 = sphi 0, %s107
      %s108 = sphi 0, %s105
      %s109 = sphi 0, %s108
      %s125 = sphi 0, %s109
      %s131 = sphi 0, %s133
      %s134 = sphi 0, %s131
      %s135 = sphi 0, %s134
      %s151 = sphi 0, %s135
      %s157 = sphi 0, %s159
      %s160 = sphi 0, %s157
      %s161 = sphi 0, %s160
      %s177 = sphi 0, %s161
      %s183 = sphi 0, %s185
      %s186 = sphi 0, %s183
      %s187 = sphi 0, %s186
      %s203 = sphi 0, %s187
    $region4: #{tpu_custom_call.1} parent=1 // loop_header_branch
      %25 = sbr.rel (%p23) target = $region8
    $region5: #{tpu_custom_call.1} parent=1 // loop_body
      %s27 = ssub.s32 %s22, 1
      %s28 = ssub.s32 %s22, 2
      %s29 = sadd.s32 %s22, 1
      %s31 = sadd.s32 %s30, 1
      %p34 = scmp.eq.s32.totalorder %s22, 2
      %p35 = scmp.ne.s32.totalorder %s30, %s32
      %p36 = scmp.eq.s32.totalorder %s22, 0
      %p37 = por %p35, %p36
      %p38 = scmp.ne.s32.totalorder %s30, %s32
      %p39 = scmp.eq.s32.totalorder %s27, 2
      %p40 = por %p38, %p39
      %p41 = scmp.ne.s32.totalorder %s32, %s33
      %p42 = scmp.eq.s32.totalorder %s27, 0
      %p43 = por %p41, %p42
      %p44 = scmp.ne.s32.totalorder %s32, %s33
      %p45 = scmp.eq.s32.totalorder %s28, 2
      %p46 = por %p44, %p45
      %p48 = scmp.ne.s32.totalorder %s33, %s47
      %p49 = scmp.eq.s32.totalorder %s28, 0
      %p50 = por %p48, %p49
      %s51 = ssub.s32 %s22, %s29
      %p52 = scmp.eq.s32.totalorder %s51, 0
      %s54 = sadd.s32 %s53, 1
      %s55 = scalar_select %p52, %s53, %s54
      %p58 = pneg %p52
      %p59 = scmp.eq.s32.totalorder %s22, 2
      %p60 = por %p58, %p59
      %p61 = scmp.ne.s32.totalorder %s53, %s56
      %p62 = scmp.eq.s32.totalorder %s22, 0
      %p63 = por %p61, %p62
      %p64 = scmp.ne.s32.totalorder %s53, %s56
      %p65 = scmp.eq.s32.totalorder %s27, 2
      %p66 = por %p64, %p65
      %p67 = scmp.ne.s32.totalorder %s56, %s57
      %p68 = scmp.eq.s32.totalorder %s27, 0
      %p69 = por %p67, %p68
      %p70 = scmp.ne.s32.totalorder %s56, %s57
      %p71 = scmp.eq.s32.totalorder %s28, 2
      %p72 = por %p70, %p71
      %p74 = scmp.ne.s32.totalorder %s57, %s73
      %p75 = scmp.eq.s32.totalorder %s28, 0
      %p76 = por %p74, %p75
      %s77 = ssub.s32 %s22, %s29
      %p78 = scmp.eq.s32.totalorder %s77, 0
      %s80 = sadd.s32 %s79, 1
      %s81 = scalar_select %p78, %s79, %s80
      %p84 = pneg %p78
      %p85 = scmp.eq.s32.totalorder %s22, 2
      %p86 = por %p84, %p85
      %p87 = scmp.ne.s32.totalorder %s79, %s82
      %p88 = scmp.eq.s32.totalorder %s22, 0
      %p89 = por %p87, %p88
      %p90 = scmp.ne.s32.totalorder %s79, %s82
      %p91 = scmp.eq.s32.totalorder %s27, 2
      %p92 = por %p90, %p91
      %p93 = scmp.ne.s32.totalorder %s82, %s83
      %p94 = scmp.eq.s32.totalorder %s27, 0
      %p95 = por %p93, %p94
      %p96 = scmp.ne.s32.totalorder %s82, %s83
      %p97 = scmp.eq.s32.totalorder %s28, 2
      %p98 = por %p96, %p97
      %p100 = scmp.ne.s32.totalorder %s83, %s99
      %p101 = scmp.eq.s32.totalorder %s28, 0
      %p102 = por %p100, %p101
      %s103 = ssub.s32 %s22, %s29
      %p104 = scmp.eq.s32.totalorder %s103, 0
      %s106 = sadd.s32 %s105, 1
      %s107 = scalar_select %p104, %s105, %s106
      %p110 = pneg %p104
      %p111 = scmp.eq.s32.totalorder %s22, 2
      %p112 = por %p110, %p111
      %p113 = scmp.ne.s32.totalorder %s105, %s108
      %p114 = scmp.eq.s32.totalorder %s22, 0
      %p115 = por %p113, %p114
      %p116 = scmp.ne.s32.totalorder %s105, %s108
      %p117 = scmp.eq.s32.totalorder %s27, 2
      %p118 = por %p116, %p117
      %p119 = scmp.ne.s32.totalorder %s108, %s109
      %p120 = scmp.eq.s32.totalorder %s27, 0
      %p121 = por %p119, %p120
      %p122 = scmp.ne.s32.totalorder %s108, %s109
      %p123 = scmp.eq.s32.totalorder %s28, 2
      %p124 = por %p122, %p123
      %p126 = scmp.ne.s32.totalorder %s109, %s125
      %p127 = scmp.eq.s32.totalorder %s28, 0
      %p128 = por %p126, %p127
      %s129 = ssub.s32 %s22, %s29
      %p130 = scmp.eq.s32.totalorder %s129, 0
      %s132 = sadd.s32 %s131, 1
      %s133 = scalar_select %p130, %s131, %s132
      %p136 = pneg %p130
      %p137 = scmp.eq.s32.totalorder %s22, 2
      %p138 = por %p136, %p137
      %p139 = scmp.ne.s32.totalorder %s131, %s134
      %p140 = scmp.eq.s32.totalorder %s22, 0
      %p141 = por %p139, %p140
      %p142 = scmp.ne.s32.totalorder %s131, %s134
      %p143 = scmp.eq.s32.totalorder %s27, 2
      %p144 = por %p142, %p143
      %p145 = scmp.ne.s32.totalorder %s134, %s135
      %p146 = scmp.eq.s32.totalorder %s27, 0
      %p147 = por %p145, %p146
      %p148 = scmp.ne.s32.totalorder %s134, %s135
      %p149 = scmp.eq.s32.totalorder %s28, 2
      %p150 = por %p148, %p149
      %p152 = scmp.ne.s32.totalorder %s135, %s151
      %p153 = scmp.eq.s32.totalorder %s28, 0
      %p154 = por %p152, %p153
      %s155 = ssub.s32 %s22, %s29
      %p156 = scmp.eq.s32.totalorder %s155, 0
      %s158 = sadd.s32 %s157, 1
      %s159 = scalar_select %p156, %s157, %s158
      %p162 = pneg %p156
      %p163 = scmp.eq.s32.totalorder %s22, 2
      %p164 = por %p162, %p163
      %p165 = scmp.ne.s32.totalorder %s157, %s160
      %p166 = scmp.eq.s32.totalorder %s22, 0
      %p167 = por %p165, %p166
      %p168 = scmp.ne.s32.totalorder %s157, %s160
      %p169 = scmp.eq.s32.totalorder %s27, 2
      %p170 = por %p168, %p169
      %p171 = scmp.ne.s32.totalorder %s160, %s161
      %p172 = scmp.eq.s32.totalorder %s27, 0
      %p173 = por %p171, %p172
      %p174 = scmp.ne.s32.totalorder %s160, %s161
      %p175 = scmp.eq.s32.totalorder %s28, 2
      %p176 = por %p174, %p175
      %p178 = scmp.ne.s32.totalorder %s161, %s177
      %p179 = scmp.eq.s32.totalorder %s28, 0
      %p180 = por %p178, %p179
      %s181 = ssub.s32 %s22, %s29
      %p182 = scmp.eq.s32.totalorder %s181, 0
      %s184 = sadd.s32 %s183, 1
      %s185 = scalar_select %p182, %s183, %s184
      %p188 = pneg %p182
      %p189 = scmp.eq.s32.totalorder %s22, 2
      %p190 = por %p188, %p189
      %p191 = scmp.ne.s32.totalorder %s183, %s186
      %p192 = scmp.eq.s32.totalorder %s22, 0
      %p193 = por %p191, %p192
      %p194 = scmp.ne.s32.totalorder %s183, %s186
      %p195 = scmp.eq.s32.totalorder %s27, 2
      %p196 = por %p194, %p195
      %p197 = scmp.ne.s32.totalorder %s186, %s187
      %p198 = scmp.eq.s32.totalorder %s27, 0
      %p199 = por %p197, %p198
      %p200 = scmp.ne.s32.totalorder %s186, %s187
      %p201 = scmp.eq.s32.totalorder %s28, 2
      %p202 = por %p200, %p201
      %p204 = scmp.ne.s32.totalorder %s187, %s203
      %p205 = scmp.eq.s32.totalorder %s28, 0
      %p206 = por %p204, %p205
      %p207 = scmp.le.s32.totalorder 1, %s22
      %p208 = scmp.lt.s32.totalorder %s22, 4
      %p209 = pnand %p207, %p208
      %p210 = pneg %p209
      // Predicated region
      $region9: #{tpu_custom_call.1} parent=5 // pred_check
        _
      $region10: #{tpu_custom_call.1} parent=5 // pred_check_branch
        %212 = sbr.rel (%p209) target = $region12
      $region11: #{tpu_custom_call.1} parent=5 // pred_region
        %s213 = ssub.s32 %s22, 1
        // Predicated region
        $region13: #{tpu_custom_call.1} parent=11 // pred_check
          %p214 = pneg %p43
        $region14: #{tpu_custom_call.1} parent=11 // pred_check_branch
          %216 = sbr.rel (%p214) target = $region16
        $region15: #{tpu_custom_call.1} parent=11 // pred_region
          %s218 = ssub.s32 128, 128
          %219 = vsyncadd [#allocation4], %s218
          %s221 = sshll.u32 [#allocation3], 4
          %s222 = int_to_ptr.vmem [resolvable:$true] %s221
          %224 = dma.hbm_to_vmem [thread:$0]  %s0, 128, %s222, [#allocation4]
        $region16: #{tpu_custom_call.1} parent=11 // pred_fallthru
          _
      $region12: #{tpu_custom_call.1} parent=5 // pred_fallthru
        _
      %p225 = scmp.lt.s32.totalorder %s22, 3
      // Predicated region
      $region17: #{tpu_custom_call.1} parent=5 // pred_check
        %p226 = pneg %p225
      $region18: #{tpu_custom_call.1} parent=5 // pred_check_branch
        %228 = sbr.rel (%p226) target = $region20
      $region19: #{tpu_custom_call.1} parent=5 // pred_region
        // Predicated region
        $region21: #{tpu_custom_call.1} parent=19 // pred_check
          %p229 = pneg %p63
        $region22: #{tpu_custom_call.1} parent=19 // pred_check_branch
          %231 = sbr.rel (%p229) target = $region24
        $region23: #{tpu_custom_call.1} parent=19 // pred_region
          %s232 = sand.u32 %s22, 1
          %s233 = scalar_lea.sflag [#allocation7], %s232
          %s234 = sand.u32 %s53, 1
          %s235 = smul.addr %s234, 8
          %s236 = scalar_lea.vmem [#allocation6], %s235
          %s238 = ssub.s32 128, 128
          %239 = vsyncadd %s233, %s238
          %s240 = smul.addr %s22, 128
          %s241 = scalar_lea.hbm %s1, %s240
          %s243 = sshll.u32 %s236, 4
          %s244 = int_to_ptr.vmem [resolvable:$true] %s243
          %246 = dma.hbm_to_vmem [thread:$0]  %s241, 128, %s244, %s233
        $region24: #{tpu_custom_call.1} parent=19 // pred_fallthru
          _
        // Predicated region
        $region25: #{tpu_custom_call.1} parent=19 // pred_check
          %p247 = pneg %p89
        $region26: #{tpu_custom_call.1} parent=19 // pred_check_branch
          %249 = sbr.rel (%p247) target = $region28
        $region27: #{tpu_custom_call.1} parent=19 // pred_region
          %s250 = sand.u32 %s22, 1
          %s251 = scalar_lea.sflag [#allocation7], %s250
          %s252 = sand.u32 %s79, 1
          %s253 = smul.addr %s252, 192
          %s254 = scalar_lea.vmem [#allocation8], %s253
          %s256 = ssub.s32 3072, 3072
          %257 = vsyncadd %s251, %s256
          %s258 = smul.addr %s22, 48
          %s259 = smul.addr %s258, 64
          %s260 = scalar_lea.hbm %s2, %s259
          %s261 = sshll.u32 %s254, 4
          %s262 = int_to_ptr.vmem [resolvable:$true] %s261
          %267 = dma.hbm_to_vmem [thread:$0]  %s260, 3072, %s262, %s251, 192, 192, 12
        $region28: #{tpu_custom_call.1} parent=19 // pred_fallthru
          _
        // Predicated region
        $region29: #{tpu_custom_call.1} parent=19 // pred_check
          %p268 = pneg %p115
        $region30: #{tpu_custom_call.1} parent=19 // pred_check_branch
          %270 = sbr.rel (%p268) target = $region32
        $region31: #{tpu_custom_call.1} parent=19 // pred_region
          %s271 = sand.u32 %s22, 1
          %s272 = scalar_lea.sflag [#allocation10], %s271
          %s273 = sand.u32 %s105, 1
          %s274 = smul.addr %s273, 192
          %s275 = scalar_lea.vmem [#allocation9], %s274
          %s277 = ssub.s32 3072, 3072
          %278 = vsyncadd %s272, %s277
          %s279 = smul.addr %s22, 48
          %s280 = smul.addr %s279, 64
          %s281 = scalar_lea.hbm %s3, %s280
          %s282 = sshll.u32 %s275, 4
          %s283 = int_to_ptr.vmem [resolvable:$true] %s282
          %288 = dma.hbm_to_vmem [thread:$0]  %s281, 3072, %s283, %s272, 192, 192, 12
        $region32: #{tpu_custom_call.1} parent=19 // pred_fallthru
          _
        // Predicated region
        $region33: #{tpu_custom_call.1} parent=19 // pred_check
          %p289 = pneg %p141
        $region34: #{tpu_custom_call.1} parent=19 // pred_check_branch
          %291 = sbr.rel (%p289) target = $region36
        $region35: #{tpu_custom_call.1} parent=19 // pred_region
          %s292 = sand.u32 %s22, 1
          %s293 = scalar_lea.sflag [#allocation10], %s292
          %s294 = sand.u32 %s131, 1
          %s295 = smul.addr %s294, 3
          %s296 = scalar_lea.vmem [#allocation11], %s295
          %s298 = ssub.s32 48, 48
          %299 = vsyncadd %s293, %s298
          %s300 = smul.addr %s22, 3
          %s301 = smul.addr %s300, 16
          %s302 = scalar_lea.hbm %s4, %s301
          %s304 = sshll.u32 %s296, 4
          %s305 = int_to_ptr.vmem [resolvable:$true] %s304
          %307 = dma.hbm_to_vmem [thread:$0]  %s302, 48, %s305, %s293
        $region36: #{tpu_custom_call.1} parent=19 // pred_fallthru
          _
        // Predicated region
        $region37: #{tpu_custom_call.1} parent=19 // pred_check
          %p308 = pneg %p167
        $region38: #{tpu_custom_call.1} parent=19 // pred_check_branch
          %310 = sbr.rel (%p308) target = $region40
        $region39: #{tpu_custom_call.1} parent=19 // pred_region
          %p311 = scmp.lt.s32.totalorder %s22, 2
          %s312 = scalar_select %p311, %s22, 2
          %s313 = scalar_lea.vmem %s5, %s312
        $region40: #{tpu_custom_call.1} parent=19 // pred_fallthru
          _
      $region20: #{tpu_custom_call.1} parent=5 // pred_fallthru
        _
      %p314 = scmp.le.s32.totalorder 1, %s22
      %p315 = scmp.lt.s32.totalorder %s22, 4
      %p316 = pnand %p314, %p315
      %p317 = pneg %p316
      // Predicated region
      $region41: #{tpu_custom_call.1} parent=5 // pred_check
        _
      $region42: #{tpu_custom_call.1} parent=5 // pred_check_branch
        %319 = sbr.rel (%p316) target = $region44
      $region43: #{tpu_custom_call.1} parent=5 // pred_region
        %s320 = ssub.s32 %s22, 1
        // Predicated region
        $region45: #{tpu_custom_call.1} parent=43 // pred_check
          %p321 = pneg %p43
        $region46: #{tpu_custom_call.1} parent=43 // pred_check_branch
          %323 = sbr.rel (%p321) target = $region48
        $region47: #{tpu_custom_call.1} parent=43 // pred_region
          %324 = dma.done [#allocation4], 128
        $region48: #{tpu_custom_call.1} parent=43 // pred_fallthru
          _
        %s325 = sand.u32 %s27, 1
        %s326 = scalar_lea.sflag [#allocation7], %s325
        %s327 = sand.u32 %s56, 1
        %s328 = smul.addr %s327, 8
        %s329 = scalar_lea.vmem [#allocation6], %s328
        // Predicated region
        $region49: #{tpu_custom_call.1} parent=43 // pred_check
          %p330 = pneg %p69
        $region50: #{tpu_custom_call.1} parent=43 // pred_check_branch
          %332 = sbr.rel (%p330) target = $region52
        $region51: #{tpu_custom_call.1} parent=43 // pred_region
          %333 = dma.done %s326, 128
        $region52: #{tpu_custom_call.1} parent=43 // pred_fallthru
          _
        %s334 = sand.u32 %s27, 1
        %s335 = scalar_lea.sflag [#allocation7], %s334
        %s336 = sand.u32 %s82, 1
        %s337 = smul.addr %s336, 192
        %s338 = scalar_lea.vmem [#allocation8], %s337
        // Predicated region
        $region53: #{tpu_custom_call.1} parent=43 // pred_check
          %p339 = pneg %p95
        $region54: #{tpu_custom_call.1} parent=43 // pred_check_branch
          %341 = sbr.rel (%p339) target = $region56
        $region55: #{tpu_custom_call.1} parent=43 // pred_region
          %342 = dma.done %s335, 3072
        $region56: #{tpu_custom_call.1} parent=43 // pred_fallthru
          _
        %s343 = sand.u32 %s27, 1
        %s344 = scalar_lea.sflag [#allocation10], %s343
        %s345 = sand.u32 %s108, 1
        %s346 = smul.addr %s345, 192
        %s347 = scalar_lea.vmem [#allocation9], %s346
        // Predicated region
        $region57: #{tpu_custom_call.1} parent=43 // pred_check
          %p348 = pneg %p121
        $region58: #{tpu_custom_call.1} parent=43 // pred_check_branch
          %350 = sbr.rel (%p348) target = $region60
        $region59: #{tpu_custom_call.1} parent=43 // pred_region
          %351 = dma.done %s344, 3072
        $region60: #{tpu_custom_call.1} parent=43 // pred_fallthru
          _
        %s352 = sand.u32 %s27, 1
        %s353 = scalar_lea.sflag [#allocation10], %s352
        %s354 = sand.u32 %s134, 1
        %s355 = smul.addr %s354, 3
        %s356 = scalar_lea.vmem [#allocation11], %s355
        // Predicated region
        $region61: #{tpu_custom_call.1} parent=43 // pred_check
          %p357 = pneg %p147
        $region62: #{tpu_custom_call.1} parent=43 // pred_check_branch
          %359 = sbr.rel (%p357) target = $region64
        $region63: #{tpu_custom_call.1} parent=43 // pred_region
          %360 = dma.done %s353, 48
        $region64: #{tpu_custom_call.1} parent=43 // pred_fallthru
          _
        %p361 = pneg %p43
        %p362 = pneg %p40
        %s363 = sand.u32 %s27, 1
        %s364 = scalar_lea.sflag [#allocation7], %s363
        %s365 = sand.u32 %s56, 1
        %s366 = smul.addr %s365, 8
        %s367 = scalar_lea.vmem [#allocation6], %s366
        %p368 = pneg %p69
        %p369 = pneg %p66
        %s370 = sand.u32 %s27, 1
        %s371 = scalar_lea.sflag [#allocation7], %s370
        %s372 = sand.u32 %s82, 1
        %s373 = smul.addr %s372, 192
        %s374 = scalar_lea.vmem [#allocation8], %s373
        %p375 = pneg %p95
        %p376 = pneg %p92
        %s377 = sand.u32 %s27, 1
        %s378 = scalar_lea.sflag [#allocation10], %s377
        %s379 = sand.u32 %s108, 1
        %s380 = smul.addr %s379, 192
        %s381 = scalar_lea.vmem [#allocation9], %s380
        %p382 = pneg %p121
        %p383 = pneg %p118
        %s384 = sand.u32 %s27, 1
        %s385 = scalar_lea.sflag [#allocation10], %s384
        %s386 = sand.u32 %s134, 1
        %s387 = smul.addr %s386, 3
        %s388 = scalar_lea.vmem [#allocation11], %s387
        %p389 = pneg %p147
        %p390 = pneg %p144
        %p391 = scmp.lt.s32.totalorder %s27, 2
        %s392 = scalar_select %p391, %s27, 2
        %s393 = scalar_lea.vmem %s5, %s392
        %p394 = pneg %p173
        %p395 = pneg %p170
        %p396 = pneg %p199
        %p397 = pneg %p196
        %s398 = sand.u32 %s186, 1
        %s399 = scalar_lea.sflag [#allocation5], %s398
        %s400 = sand.u32 %s186, 1
        %s401 = smul.addr %s400, 8
        %s402 = scalar_lea.vmem [#allocation12], %s401
        %p403 = scmp.lt.s32.totalorder %s27, 2
        %s404 = scalar_select %p403, %s27, 2
        %s405 = scalar_lea.vmem %s5, %s404
        %p407 = scmp.eq.s32.totalorder %s27, 0
        // Predicated region
        $region65: #{tpu_custom_call.1} parent=43 // pred_check
          %p408 = pneg %p407
        $region66: #{tpu_custom_call.1} parent=43 // pred_check_branch
          %410 = sbr.rel (%p408) target = $region68
        $region67: #{tpu_custom_call.1} parent=43 // pred_region
          %v411 = vld [vmem:[#allocation3] sm:$0xff]
          %412 = vst [vmem:[#allocation2] sm:$0xff] %v411
        $region68: #{tpu_custom_call.1} parent=43 // pred_fallthru
          _
        %v413 = vld [vmem:[#allocation2] sm:$0xff]
        %v414 = vld [vmem:[%s329] sm:$0xff]
        %v415 = vpack.c.bf16 %v413, %v413
        %v416 = vld [vmem:[%s338] sm:$0xff]
        %v417 = vld [vmem:[%s338 + $0x8] sm:$0xf]
        %v418 = vld [vmem:[%s338 + $0xc] sm:$0xff]
        %v419 = vld [vmem:[%s338 + $0x14] sm:$0xf]
        %v420 = vld [vmem:[%s338 + $0x18] sm:$0xff]
        %v421 = vld [vmem:[%s338 + $0x20] sm:$0xf]
        %v422 = vld [vmem:[%s338 + $0x24] sm:$0xff]
        %v423 = vld [vmem:[%s338 + $0x2c] sm:$0xf]
        %v424 = vld [vmem:[%s338 + $0x30] sm:$0xff]
        %v425 = vld [vmem:[%s338 + $0x38] sm:$0xf]
        %v426 = vld [vmem:[%s338 + $0x3c] sm:$0xff]
        %v427 = vld [vmem:[%s338 + $0x44] sm:$0xf]
        %v428 = vld [vmem:[%s338 + $0x48] sm:$0xff]
        %v429 = vld [vmem:[%s338 + $0x50] sm:$0xf]
        %v430 = vld [vmem:[%s338 + $0x54] sm:$0xff]
        %v431 = vld [vmem:[%s338 + $0x5c] sm:$0xf]
        %v432 = vld [vmem:[%s338 + $0x60] sm:$0xff]
        %v433 = vld [vmem:[%s338 + $0x68] sm:$0xf]
        %v434 = vld [vmem:[%s338 + $0x6c] sm:$0xff]
        %v435 = vld [vmem:[%s338 + $0x74] sm:$0xf]
        %v436 = vld [vmem:[%s338 + $0x78] sm:$0xff]
        %v437 = vld [vmem:[%s338 + $0x80] sm:$0xf]
        %v438 = vld [vmem:[%s338 + $0x84] sm:$0xff]
        %v439 = vld [vmem:[%s338 + $0x8c] sm:$0xf]
        %v440 = vld [vmem:[%s338 + $0x90] sm:$0xff]
        %v441 = vld [vmem:[%s338 + $0x98] sm:$0xf]
        %v442 = vld [vmem:[%s338 + $0x9c] sm:$0xff]
        %v443 = vld [vmem:[%s338 + $0xa4] sm:$0xf]
        %v444 = vld [vmem:[%s338 + $0xa8] sm:$0xff]
        %v445 = vld [vmem:[%s338 + $0xb0] sm:$0xf]
        %v446 = vld [vmem:[%s338 + $0xb4] sm:$0xff]
        %v447 = vld [vmem:[%s338 + $0xbc] sm:$0xf]
        %v448 = vld [vmem:[%s356] sm:$0x7]
        %v450 = vlaneseq
        %v451 = vshrl.u32 %v450, 7
        %v452 = vsub.s32 0, %v451
        %v453 = vrot.slane %v448, %v452
        %v454 = vlaneseq
        %v455 = vshrl.u32 %v454, 7
        %v456 = vsub.s32 1, %v455
        %v457 = vrot.slane %v448, %v456
        %v458 = vlaneseq
        %v459 = vshrl.u32 %v458, 7
        %v460 = vsub.s32 2, %v459
        %v461 = vrot.slane %v448, %v460
        %v497 = vunpack.c.l.b16 %v416
        %v498 = vunpack.c.h.b16 %v416
        %v499 = vunpack.c.l.b16 %v417
        %v500 = vunpack.c.l.b16 %v418
        %v501 = vunpack.c.h.b16 %v418
        %v502 = vunpack.c.l.b16 %v419
        %v503 = vunpack.c.l.b16 %v420
        %v504 = vunpack.c.h.b16 %v420
        %v505 = vunpack.c.l.b16 %v421
        %v506 = vunpack.c.l.b16 %v422
        %v507 = vunpack.c.h.b16 %v422
        %v508 = vunpack.c.l.b16 %v423
        %v509 = vunpack.c.l.b16 %v424
        %v510 = vunpack.c.h.b16 %v424
        %v511 = vunpack.c.l.b16 %v425
        %v512 = vunpack.c.l.b16 %v426
        %v513 = vunpack.c.h.b16 %v426
        %v514 = vunpack.c.l.b16 %v427
        %v515 = vunpack.c.l.b16 %v428
        %v516 = vunpack.c.h.b16 %v428
        %v517 = vunpack.c.l.b16 %v429
        %v518 = vunpack.c.l.b16 %v430
        %v519 = vunpack.c.h.b16 %v430
        %v520 = vunpack.c.l.b16 %v431
        %v521 = vunpack.c.l.b16 %v432
        %v522 = vunpack.c.h.b16 %v432
        %v523 = vunpack.c.l.b16 %v433
        %v524 = vunpack.c.l.b16 %v434
        %v525 = vunpack.c.h.b16 %v434
        %v526 = vunpack.c.l.b16 %v435
        %v527 = vunpack.c.l.b16 %v436
        %v528 = vunpack.c.h.b16 %v436
        %v529 = vunpack.c.l.b16 %v437
        %v530 = vunpack.c.l.b16 %v438
        %v531 = vunpack.c.h.b16 %v438
        %v532 = vunpack.c.l.b16 %v439
        %v533 = vunpack.c.l.b16 %v440
        %v534 = vunpack.c.h.b16 %v440
        %v535 = vunpack.c.l.b16 %v441
        %v536 = vunpack.c.l.b16 %v442
        %v537 = vunpack.c.h.b16 %v442
        %v538 = vunpack.c.l.b16 %v443
        %v539 = vunpack.c.l.b16 %v444
        %v540 = vunpack.c.h.b16 %v444
        %v541 = vunpack.c.l.b16 %v445
        %v542 = vunpack.c.l.b16 %v446
        %v543 = vunpack.c.h.b16 %v446
        %v544 = vunpack.c.l.b16 %v447
        %v545 = vpack.c.b16 %v500, %v497
        %v546 = vpack.c.b16 %v501, %v498
        %v547 = vpack.c.b16 %v502, %v499
        %v548 = vpack.c.b16 %v506, %v503
        %v549 = vpack.c.b16 %v507, %v504
        %v550 = vpack.c.b16 %v508, %v505
        %v551 = vpack.c.b16 %v512, %v509
        %v552 = vpack.c.b16 %v513, %v510
        %v553 = vpack.c.b16 %v514, %v511
        %v554 = vpack.c.b16 %v518, %v515
        %v555 = vpack.c.b16 %v519, %v516
        %v556 = vpack.c.b16 %v520, %v517
        %v557 = vpack.c.b16 %v524, %v521
        %v558 = vpack.c.b16 %v525, %v522
        %v559 = vpack.c.b16 %v526, %v523
        %v560 = vpack.c.b16 %v530, %v527
        %v561 = vpack.c.b16 %v531, %v528
        %v562 = vpack.c.b16 %v532, %v529
        %v563 = vpack.c.b16 %v536, %v533
        %v564 = vpack.c.b16 %v537, %v534
        %v565 = vpack.c.b16 %v538, %v535
        %v566 = vpack.c.b16 %v542, %v539
        %v567 = vpack.c.b16 %v543, %v540
        %v568 = vpack.c.b16 %v544, %v541
        %593 = vmatprep.subr.bf16.mxu0 %v567
        %594 = vmatpush1.bf16.msra.mxu0 %v566
        %595 = vmatprep.subr.bf16.mxu0 %v564
        %596 = vmatpush1.bf16.msra.mxu0 %v563
        %597 = vmatprep.subr.bf16.mxu0 %v561
        %598 = vmatpush1.bf16.msra.mxu0 %v560
        %599 = vmatprep.subr.bf16.mxu0 %v558
        %600 = vmatpush1.bf16.msra.mxu0 %v557
        %601 = vmatprep.subr.bf16.mxu0 %v555
        %602 = vmatpush1.bf16.msra.mxu0 %v554
        %603 = vmatprep.subr.bf16.mxu0 %v552
        %604 = vmatpush1.bf16.msra.mxu0 %v551
        %605 = vmatprep.subr.bf16.mxu0 %v549
        %606 = vmatpush1.bf16.msra.mxu0 %v548
        %607 = vmatprep.subr.bf16.mxu0 %v546
        %608 = vmatpush1.bf16.msra.mxu0 %v545
        %609 = vmatprep.subr.bf16.mxu0 0
        %610 = vmatpush2.bf16.msra.mxu0 0
        %611 = vmatprep.subr.bf16.mxu0 0
        %612 = vmatpush2.bf16.msra.mxu0 0
        %613 = vmatprep.subr.bf16.mxu0 0
        %614 = vmatpush2.bf16.msra.mxu0 0
        %615 = vmatprep.subr.bf16.mxu0 0
        %616 = vmatpush2.bf16.msra.mxu0 0
        %617 = vmatprep.subr.bf16.mxu0 0
        %618 = vmatpush2.bf16.msra.mxu0 0
        %619 = vmatprep.subr.bf16.mxu0 0
        %620 = vmatpush2.bf16.msra.mxu0 0
        %621 = vmatprep.subr.bf16.mxu0 0
        %622 = vmatpush2.bf16.msra.mxu0 0
        %623 = vmatprep.subr.bf16.mxu0 0
        %624 = vmatpush2.bf16.msra.mxu0 0
        %625 = vmatprep.mubr.bf16.mxu0 0
        %626 = vmatmul.mubr.bf16.gmra.mxu0 %v415
        %v627 = vpop.f32.mrf.mxu0
        %v628 = vadd.f32 %v453, %v627
        %v629 = vpop.f32.mrf.mxu0
        %v630 = vadd.f32 %v457, %v629
        %v631 = vpop.f32.mrf.mxu0
        %v632 = vpop.f32.mrf.mxu0
        %633 = vdwg.mxu0
        %634 = vmatprep.subr.bf16.mxu0 0
        %635 = vmatpush1.bf16.msra.mxu0 %v568
        %636 = vmatprep.subr.bf16.mxu0 0
        %637 = vmatpush1.bf16.msra.mxu0 %v565
        %638 = vmatprep.subr.bf16.mxu0 0
        %639 = vmatpush1.bf16.msra.mxu0 %v562
        %640 = vmatprep.subr.bf16.mxu0 0
        %641 = vmatpush1.bf16.msra.mxu0 %v559
        %642 = vmatprep.subr.bf16.mxu0 0
        %643 = vmatpush1.bf16.msra.mxu0 %v556
        %644 = vmatprep.subr.bf16.mxu0 0
        %645 = vmatpush1.bf16.msra.mxu0 %v553
        %646 = vmatprep.subr.bf16.mxu0 0
        %647 = vmatpush1.bf16.msra.mxu0 %v550
        %648 = vmatprep.subr.bf16.mxu0 0
        %649 = vmatpush1.bf16.msra.mxu0 %v547
        %650 = vmatprep.subr.bf16.mxu0 0
        %651 = vmatpush2.bf16.msra.mxu0 0
        %652 = vmatprep.subr.bf16.mxu0 0
        %653 = vmatpush2.bf16.msra.mxu0 0
        %654 = vmatprep.subr.bf16.mxu0 0
        %655 = vmatpush2.bf16.msra.mxu0 0
        %656 = vmatprep.subr.bf16.mxu0 0
        %657 = vmatpush2.bf16.msra.mxu0 0
        %658 = vmatprep.subr.bf16.mxu0 0
        %659 = vmatpush2.bf16.msra.mxu0 0
        %660 = vmatprep.subr.bf16.mxu0 0
        %661 = vmatpush2.bf16.msra.mxu0 0
        %662 = vmatprep.subr.bf16.mxu0 0
        %663 = vmatpush2.bf16.msra.mxu0 0
        %664 = vmatprep.subr.bf16.mxu0 0
        %665 = vmatpush2.bf16.msra.mxu0 0
        %666 = vmatprep.mubr.bf16.mxu0 0
        %667 = vmatmul.mubr.bf16.gmra.mxu0 %v415
        %v668 = vpop.f32.mrf.mxu0
        %v669 = vadd.f32 %v461, %v668
        %v670 = vpop.f32.mrf.mxu0
        %v671 = vpop.f32.mrf.mxu0
        %v672 = vpop.f32.mrf.mxu0
        %673 = vdwg.mxu0
        %v674 = vpack.c.bf16 %v414, %v414
        %v675 = vld [vmem:[%s347] sm:$0xff]
        %v676 = vld [vmem:[%s347 + $0x8] sm:$0xf]
        %v677 = vld [vmem:[%s347 + $0xc] sm:$0xff]
        %v678 = vld [vmem:[%s347 + $0x14] sm:$0xf]
        %v679 = vld [vmem:[%s347 + $0x18] sm:$0xff]
        %v680 = vld [vmem:[%s347 + $0x20] sm:$0xf]
        %v681 = vld [vmem:[%s347 + $0x24] sm:$0xff]
        %v682 = vld [vmem:[%s347 + $0x2c] sm:$0xf]
        %v683 = vld [vmem:[%s347 + $0x30] sm:$0xff]
        %v684 = vld [vmem:[%s347 + $0x38] sm:$0xf]
        %v685 = vld [vmem:[%s347 + $0x3c] sm:$0xff]
        %v686 = vld [vmem:[%s347 + $0x44] sm:$0xf]
        %v687 = vld [vmem:[%s347 + $0x48] sm:$0xff]
        %v688 = vld [vmem:[%s347 + $0x50] sm:$0xf]
        %v689 = vld [vmem:[%s347 + $0x54] sm:$0xff]
        %v690 = vld [vmem:[%s347 + $0x5c] sm:$0xf]
        %v691 = vld [vmem:[%s347 + $0x60] sm:$0xff]
        %v692 = vld [vmem:[%s347 + $0x68] sm:$0xf]
        %v693 = vld [vmem:[%s347 + $0x6c] sm:$0xff]
        %v694 = vld [vmem:[%s347 + $0x74] sm:$0xf]
        %v695 = vld [vmem:[%s347 + $0x78] sm:$0xff]
        %v696 = vld [vmem:[%s347 + $0x80] sm:$0xf]
        %v697 = vld [vmem:[%s347 + $0x84] sm:$0xff]
        %v698 = vld [vmem:[%s347 + $0x8c] sm:$0xf]
        %v699 = vld [vmem:[%s347 + $0x90] sm:$0xff]
        %v700 = vld [vmem:[%s347 + $0x98] sm:$0xf]
        %v701 = vld [vmem:[%s347 + $0x9c] sm:$0xff]
        %v702 = vld [vmem:[%s347 + $0xa4] sm:$0xf]
        %v703 = vld [vmem:[%s347 + $0xa8] sm:$0xff]
        %v704 = vld [vmem:[%s347 + $0xb0] sm:$0xf]
        %v705 = vld [vmem:[%s347 + $0xb4] sm:$0xff]
        %v706 = vld [vmem:[%s347 + $0xbc] sm:$0xf]
        %v739 = vunpack.c.l.b16 %v675
        %v740 = vunpack.c.h.b16 %v675
        %v741 = vunpack.c.l.b16 %v676
        %v742 = vunpack.c.l.b16 %v677
        %v743 = vunpack.c.h.b16 %v677
        %v744 = vunpack.c.l.b16 %v678
        %v745 = vunpack.c.l.b16 %v679
        %v746 = vunpack.c.h.b16 %v679
        %v747 = vunpack.c.l.b16 %v680
        %v748 = vunpack.c.l.b16 %v681
        %v749 = vunpack.c.h.b16 %v681
        %v750 = vunpack.c.l.b16 %v682
        %v751 = vunpack.c.l.b16 %v683
        %v752 = vunpack.c.h.b16 %v683
        %v753 = vunpack.c.l.b16 %v684
        %v754 = vunpack.c.l.b16 %v685
        %v755 = vunpack.c.h.b16 %v685
        %v756 = vunpack.c.l.b16 %v686
        %v757 = vunpack.c.l.b16 %v687
        %v758 = vunpack.c.h.b16 %v687
        %v759 = vunpack.c.l.b16 %v688
        %v760 = vunpack.c.l.b16 %v689
        %v761 = vunpack.c.h.b16 %v689
        %v762 = vunpack.c.l.b16 %v690
        %v763 = vunpack.c.l.b16 %v691
        %v764 = vunpack.c.h.b16 %v691
        %v765 = vunpack.c.l.b16 %v692
        %v766 = vunpack.c.l.b16 %v693
        %v767 = vunpack.c.h.b16 %v693
        %v768 = vunpack.c.l.b16 %v694
        %v769 = vunpack.c.l.b16 %v695
        %v770 = vunpack.c.h.b16 %v695
        %v771 = vunpack.c.l.b16 %v696
        %v772 = vunpack.c.l.b16 %v697
        %v773 = vunpack.c.h.b16 %v697
        %v774 = vunpack.c.l.b16 %v698
        %v775 = vunpack.c.l.b16 %v699
        %v776 = vunpack.c.h.b16 %v699
        %v777 = vunpack.c.l.b16 %v700
        %v778 = vunpack.c.l.b16 %v701
        %v779 = vunpack.c.h.b16 %v701
        %v780 = vunpack.c.l.b16 %v702
        %v781 = vunpack.c.l.b16 %v703
        %v782 = vunpack.c.h.b16 %v703
        %v783 = vunpack.c.l.b16 %v704
        %v784 = vunpack.c.l.b16 %v705
        %v785 = vunpack.c.h.b16 %v705
        %v786 = vunpack.c.l.b16 %v706
        %v787 = vpack.c.b16 %v742, %v739
        %v788 = vpack.c.b16 %v743, %v740
        %v789 = vpack.c.b16 %v744, %v741
        %v790 = vpack.c.b16 %v748, %v745
        %v791 = vpack.c.b16 %v749, %v746
        %v792 = vpack.c.b16 %v750, %v747
        %v793 = vpack.c.b16 %v754, %v751
        %v794 = vpack.c.b16 %v755, %v752
        %v795 = vpack.c.b16 %v756, %v753
        %v796 = vpack.c.b16 %v760, %v757
        %v797 = vpack.c.b16 %v761, %v758
        %v798 = vpack.c.b16 %v762, %v759
        %v799 = vpack.c.b16 %v766, %v763
        %v800 = vpack.c.b16 %v767, %v764
        %v801 = vpack.c.b16 %v768, %v765
        %v802 = vpack.c.b16 %v772, %v769
        %v803 = vpack.c.b16 %v773, %v770
        %v804 = vpack.c.b16 %v774, %v771
        %v805 = vpack.c.b16 %v778, %v775
        %v806 = vpack.c.b16 %v779, %v776
        %v807 = vpack.c.b16 %v780, %v777
        %v808 = vpack.c.b16 %v784, %v781
        %v809 = vpack.c.b16 %v785, %v782
        %v810 = vpack.c.b16 %v786, %v783
        %835 = vmatprep.subr.bf16.mxu0 %v809
        %836 = vmatpush1.bf16.msra.mxu0 %v808
        %837 = vmatprep.subr.bf16.mxu0 %v806
        %838 = vmatpush1.bf16.msra.mxu0 %v805
        %839 = vmatprep.subr.bf16.mxu0 %v803
        %840 = vmatpush1.bf16.msra.mxu0 %v802
        %841 = vmatprep.subr.bf16.mxu0 %v800
        %842 = vmatpush1.bf16.msra.mxu0 %v799
        %843 = vmatprep.subr.bf16.mxu0 %v797
        %844 = vmatpush1.bf16.msra.mxu0 %v796
        %845 = vmatprep.subr.bf16.mxu0 %v794
        %846 = vmatpush1.bf16.msra.mxu0 %v793
        %847 = vmatprep.subr.bf16.mxu0 %v791
        %848 = vmatpush1.bf16.msra.mxu0 %v790
        %849 = vmatprep.subr.bf16.mxu0 %v788
        %850 = vmatpush1.bf16.msra.mxu0 %v787
        %851 = vmatprep.subr.bf16.mxu0 0
        %852 = vmatpush2.bf16.msra.mxu0 0
        %853 = vmatprep.subr.bf16.mxu0 0
        %854 = vmatpush2.bf16.msra.mxu0 0
        %855 = vmatprep.subr.bf16.mxu0 0
        %856 = vmatpush2.bf16.msra.mxu0 0
        %857 = vmatprep.subr.bf16.mxu0 0
        %858 = vmatpush2.bf16.msra.mxu0 0
        %859 = vmatprep.subr.bf16.mxu0 0
        %860 = vmatpush2.bf16.msra.mxu0 0
        %861 = vmatprep.subr.bf16.mxu0 0
        %862 = vmatpush2.bf16.msra.mxu0 0
        %863 = vmatprep.subr.bf16.mxu0 0
        %864 = vmatpush2.bf16.msra.mxu0 0
        %865 = vmatprep.subr.bf16.mxu0 0
        %866 = vmatpush2.bf16.msra.mxu0 0
        %867 = vmatprep.mubr.bf16.mxu0 0
        %868 = vmatmul.mubr.bf16.gmra.mxu0 %v674
        %v869 = vpop.f32.mrf.mxu0
        %v870 = vadd.f32 0.0, %v869
        %v871 = vpop.f32.mrf.mxu0
        %v872 = vadd.f32 0.0, %v871
        %v873 = vpop.f32.mrf.mxu0
        %v874 = vpop.f32.mrf.mxu0
        %875 = vdwg.mxu0
        %876 = vmatprep.subr.bf16.mxu0 0
        %877 = vmatpush1.bf16.msra.mxu0 %v810
        %878 = vmatprep.subr.bf16.mxu0 0
        %879 = vmatpush1.bf16.msra.mxu0 %v807
        %880 = vmatprep.subr.bf16.mxu0 0
        %881 = vmatpush1.bf16.msra.mxu0 %v804
        %882 = vmatprep.subr.bf16.mxu0 0
        %883 = vmatpush1.bf16.msra.mxu0 %v801
        %884 = vmatprep.subr.bf16.mxu0 0
        %885 = vmatpush1.bf16.msra.mxu0 %v798
        %886 = vmatprep.subr.bf16.mxu0 0
        %887 = vmatpush1.bf16.msra.mxu0 %v795
        %888 = vmatprep.subr.bf16.mxu0 0
        %889 = vmatpush1.bf16.msra.mxu0 %v792
        %890 = vmatprep.subr.bf16.mxu0 0
        %891 = vmatpush1.bf16.msra.mxu0 %v789
        %892 = vmatprep.subr.bf16.mxu0 0
        %893 = vmatpush2.bf16.msra.mxu0 0
        %894 = vmatprep.subr.bf16.mxu0 0
        %895 = vmatpush2.bf16.msra.mxu0 0
        %896 = vmatprep.subr.bf16.mxu0 0
        %897 = vmatpush2.bf16.msra.mxu0 0
        %898 = vmatprep.subr.bf16.mxu0 0
        %899 = vmatpush2.bf16.msra.mxu0 0
        %900 = vmatprep.subr.bf16.mxu0 0
        %901 = vmatpush2.bf16.msra.mxu0 0
        %902 = vmatprep.subr.bf16.mxu0 0
        %903 = vmatpush2.bf16.msra.mxu0 0
        %904 = vmatprep.subr.bf16.mxu0 0
        %905 = vmatpush2.bf16.msra.mxu0 0
        %906 = vmatprep.subr.bf16.mxu0 0
        %907 = vmatpush2.bf16.msra.mxu0 0
        %908 = vmatprep.mubr.bf16.mxu0 0
        %909 = vmatmul.mubr.bf16.gmra.mxu0 %v674
        %v910 = vpop.f32.mrf.mxu0
        %v911 = vadd.f32 0.0, %v910
        %v912 = vpop.f32.mrf.mxu0
        %v913 = vpop.f32.mrf.mxu0
        %v914 = vpop.f32.mrf.mxu0
        %915 = vdwg.mxu0
        %v916 = vadd.f32 %v628, %v870
        %v917 = vxor.u32 %v916, 2147483648
        %v918 = vmul.f32 %v917, 1.442695
        %v919 = vpow.pop %v918
        %v920 = vadd.f32 %v919, 1.0
        %v921 = vrcp.pop %v920
        %v922 = vmul.f32 1.0, %v921
        %v923 = vadd.f32 %v630, %v872
        %v924 = vxor.u32 %v923, 2147483648
        %v925 = vmul.f32 %v924, 1.442695
        %v926 = vpow.pop %v925
        %v927 = vadd.f32 %v926, 1.0
        %v928 = vrcp.pop %v927
        %v929 = vmul.f32 1.0, %v928
        %v930 = vld [vmem:[%s405] sm:$0x1]
        %v932 = vlaneseq
        %v933 = vshrl.u32 %v932, 7
        %v934 = vsub.s32 0, %v933
        %v935 = vrot.slane %v930, %v934
        %v937 = vadd.f32 %v911, %v935
        %v938 = vmul.f32 %v922, %v937
        %v939 = vadd.f32 %v669, %v938
        %v940 = vtanh.pop %v939
        %v941 = vsub.f32 1.0, %v929
        %v942 = vmul.f32 %v941, %v940
        %v943 = vmul.f32 %v929, %v414
        %v944 = vadd.f32 %v942, %v943
        %945 = vst [vmem:[%s402] sm:$0xff] %v944
        %946 = vst [vmem:[#allocation2] sm:$0xff] %v944
        %s947 = sand.u32 %s186, 1
        %s948 = scalar_lea.sflag [#allocation5], %s947
        %s949 = sand.u32 %s186, 1
        %s950 = smul.addr %s949, 8
        %s951 = scalar_lea.vmem [#allocation12], %s950
        // Predicated region
        $region69: #{tpu_custom_call.1} parent=43 // pred_check
          %p952 = pneg %p196
        $region70: #{tpu_custom_call.1} parent=43 // pred_check_branch
          %954 = sbr.rel (%p952) target = $region72
        $region71: #{tpu_custom_call.1} parent=43 // pred_region
          %s956 = ssub.s32 128, 128
          %957 = vsyncadd %s948, %s956
          %s958 = smul.addr %s27, 128
          %s959 = scalar_lea.hbm %s6, %s958
          %s961 = sshll.u32 %s951, 4
          %s962 = int_to_ptr.vmem [resolvable:$true] %s961
          %964 = dma.vmem_to_hbm [thread:$0]  %s962, 128, %s959, %s948
        $region72: #{tpu_custom_call.1} parent=43 // pred_fallthru
          _
      $region44: #{tpu_custom_call.1} parent=5 // pred_fallthru
        _
      %p965 = scmp.le.s32.totalorder 2, %s22
      // Predicated region
      $region73: #{tpu_custom_call.1} parent=5 // pred_check
        %p966 = pneg %p965
      $region74: #{tpu_custom_call.1} parent=5 // pred_check_branch
        %968 = sbr.rel (%p966) target = $region76
      $region75: #{tpu_custom_call.1} parent=5 // pred_region
        %s969 = ssub.s32 %s22, 2
        // Predicated region
        $region77: #{tpu_custom_call.1} parent=75 // pred_check
          %p970 = pneg %p202
        $region78: #{tpu_custom_call.1} parent=75 // pred_check_branch
          %972 = sbr.rel (%p970) target = $region80
        $region79: #{tpu_custom_call.1} parent=75 // pred_region
          %s973 = sand.u32 %s187, 1
          %s974 = scalar_lea.sflag [#allocation5], %s973
          %s975 = sand.u32 %s187, 1
          %s976 = smul.addr %s975, 8
          %s977 = scalar_lea.vmem [#allocation12], %s976
          %978 = dma.done %s974, 128
        $region80: #{tpu_custom_call.1} parent=75 // pred_fallthru
          _
      $region76: #{tpu_custom_call.1} parent=5 // pred_fallthru
        _
    $region6: #{tpu_custom_call.1} parent=1 // loop_footer
      %s26 = sadd.s32 1, %s22
    $region7: #{tpu_custom_call.1} parent=1 // loop_footer_branch
      %21 = sbr.rel target = $region3
    $region8: #{tpu_custom_call.1} parent=1 // loop_exit
      _
    %979 = vsyncpa [#allocation4], 1
    %s980 = scalar_lea.sflag [#allocation4], 1
    %981 = vsyncpa %s980, 1
    %982 = vsyncpa [#allocation7], 1
    %s983 = scalar_lea.sflag [#allocation7], 1
    %984 = vsyncpa %s983, 1
    %985 = vsyncpa [#allocation10], 1
    %s986 = scalar_lea.sflag [#allocation10], 1
    %987 = vsyncpa %s986, 1
    %988 = vsyncpa [#allocation5], 1
    %s989 = scalar_lea.sflag [#allocation5], 1
    %990 = vsyncpa %s989, 1

</llo_original>
